<compile_context>
chip_gen: v5e
topology: v5e:2x2
jax: 0.10.0
libtpu: 0.0.40
codegen_flags: <defaults>
</compile_context>

<pallas_src>
import math
from functools import partial
from itertools import pairwise

import jax
import jax.numpy as jnp
from jax.experimental import pallas as pl
from jax.experimental.pallas import tpu as pltpu

_LANE = 128     # last-dim (lane) tile unit
_SUBLANE = 8    # second-to-last (sublane) tile unit


def _round_up(n, m):
    return ((n + m - 1) // m) * m


# ---------------------------------------------------------------------------
# Fused MLP kernel: refs = (x_ref, w0, b0, w1, b1, ..., o_ref)
# ---------------------------------------------------------------------------
def _mlp_fused_kernel(num_layers, *refs):
    x_ref = refs[0]
    o_ref = refs[-1]
    layer_refs = refs[1:-1]

    h = x_ref[...].astype(jnp.float32)
    for l in range(num_layers):
        w = layer_refs[2 * l][...]        # (K_pad, N_pad) bf16, padded rows/cols are 0
        b = layer_refs[2 * l + 1][...]    # (1, N_pad)     f32,  padded lanes are 0
        # bf16 operands -> native MXU path; accumulate in f32.
        acc = jnp.dot(h.astype(jnp.bfloat16), w, preferred_element_type=jnp.float32)
        # Bias add + ReLU in f32 on the VPU (v5e has no bf16 VPU). Padded lanes stay
        # exactly 0 through ReLU, so they never pollute the next layer's contraction.
        h = jnp.maximum(acc + b, 0.0)
    o_ref[...] = h.astype(o_ref.dtype)


# ---------------------------------------------------------------------------
# Parameter init / padding
# ---------------------------------------------------------------------------
def init_mlp_params(key, hidden_layer_sizes, num_classes, dtype=jnp.float32):
    """Mirrors torch.nn.Linear default init (U(-1/sqrt(in), 1/sqrt(in))).

    Weights are stored already transposed: (in_features, out_features)."""
    sizes = list(pairwise(hidden_layer_sizes)) + [(hidden_layer_sizes[-1], num_classes)]
    params = []
    for in_f, out_f in sizes:
        key, wk, bk = jax.random.split(key, 3)
        bound = 1.0 / math.sqrt(in_f)
        w_t = jax.random.uniform(wk, (in_f, out_f), dtype, minval=-bound, maxval=bound)
        b = jax.random.uniform(bk, (1, out_f), dtype, minval=-bound, maxval=bound)
        params.append((w_t, b))
    return params


def pad_mlp_params(params, weight_dtype=jnp.bfloat16):
    """Zero-pad every layer's (K, N) to multiples of 128; weights cast to bf16
    (MXU-native), biases kept f32 (elementwise path stays f32)."""
    padded = []
    for w_t, b in params:
        K, N = w_t.shape
        Kp, Np = _round_up(K, _LANE), _round_up(N, _LANE)
        w_pad = jnp.zeros((Kp, Np), weight_dtype).at[:K, :N].set(w_t.astype(weight_dtype))
        b_pad = jnp.zeros((1, Np), jnp.float32).at[:, :N].set(b.astype(jnp.float32))
        padded.append((w_pad, b_pad))
    return padded


# ---------------------------------------------------------------------------
# pallas_call builder
# ---------------------------------------------------------------------------
def _fused_call(x_pad, padded_params, TB, out_dtype, single_buffer_weights):
    B_pad, K0_pad = x_pad.shape
    num_layers = len(padded_params)
    N_last_pad = padded_params[-1][0].shape[1]

    const_kwargs = {}
    if single_buffer_weights:
        # Weight/bias blocks are identical every grid step; one VMEM buffer is enough.
        const_kwargs = dict(pipeline_mode=pl.Buffered(1))

    in_specs = [pl.BlockSpec((TB, K0_pad), lambda i: (i, 0))]
    flat_inputs = [x_pad]
    for w_t, b in padded_params:
        Kp, Np = w_t.shape
        in_specs.append(pl.BlockSpec((Kp, Np), lambda i: (0, 0), **const_kwargs))
        in_specs.append(pl.BlockSpec((1, Np), lambda i: (0, 0), **const_kwargs))
        flat_inputs.extend([w_t, b])

    flops = sum(2 * B_pad * w.shape[0] * w.shape[1] for w, _ in padded_params)
    weight_bytes = sum(w.size * w.dtype.itemsize + b.size * b.dtype.itemsize
                       for w, b in padded_params)
    bytes_accessed = (x_pad.size * x_pad.dtype.itemsize + weight_bytes
                      + B_pad * N_last_pad * jnp.dtype(out_dtype).itemsize)

    # Scoped-VMEM budget: double-buffered activation tiles (in + out), weights/biases
    # (x2 in case the single-buffer request is not honoured), the widest f32
    # intermediate, plus slack. Clamped so the request stays within v7x's 64 MiB.
    max_np = max(w.shape[1] for w, _ in padded_params)
    need = (2 * TB * K0_pad * 4 + 2 * TB * N_last_pad * 4 + 2 * TB * max_np * 4
            + 2 * weight_bytes + (4 << 20))
    vmem_limit = int(min(max(need, 32 << 20), 64 << 20))

    return pl.pallas_call(
        partial(_mlp_fused_kernel, num_layers),
        out_shape=jax.ShapeDtypeStruct((B_pad, N_last_pad), out_dtype),
        grid=(B_pad // TB,),
        in_specs=in_specs,
        out_specs=pl.BlockSpec((TB, N_last_pad), lambda i: (i, 0)),
        compiler_params=pltpu.CompilerParams(
            dimension_semantics=("parallel",),
            vmem_limit_bytes=vmem_limit),
        cost_estimate=pl.CostEstimate(
            flops=flops, transcendentals=0, bytes_accessed=bytes_accessed),
    )(*flat_inputs)


# ---------------------------------------------------------------------------
# Wrapper: flatten -> pad -> single fused pallas_call -> slice
# ---------------------------------------------------------------------------
def mlp_forward(x, params, padded_params):
    """Matches torch forward: flatten, then (Linear -> ReLU) for every hidden layer
    AND the output layer (final ReLU on the logits, as the module specifies)."""
    B = x.shape[0]
    x2d = x.reshape(B, -1).astype(jnp.float32)
    K0 = x2d.shape[1]
    num_classes = params[-1][0].shape[1]
    K0_pad = padded_params[0][0].shape[0]

    # Batch tile: sublane aligned, up to 256 rows (fills the 256-wide MXU on v6e/v7x
    # and amortizes per-grid-step overhead). Prefer >= 2 grid steps when the batch
    # allows it so the "parallel" axis can shard across v7x's two TensorCores.
    rows = _round_up(B, _SUBLANE)
    TB = min(256, rows)
    if rows >= 2 * _SUBLANE and rows <= TB:
        TB = _round_up(rows // 2, _SUBLANE)
    B_pad = _round_up(B, TB)

    x_pad = jnp.zeros((B_pad, K0_pad), jnp.float32).at[:B, :K0].set(x2d)

    # TODO(synk): when padded weight bytes exceed ~24 MiB (v7x scoped-VMEM budget),
    # switch to a weight-streaming path (memory_space=pl.ANY + pltpu.emit_pipeline)
    # so layer l+1's weight DMA overlaps layer l's matmul instead of keeping all
    # weights resident; fp8 weight storage on v7x is a further ~2x on top of bf16.
    try:
        out_pad = _fused_call(x_pad, padded_params, TB, x2d.dtype,
                              single_buffer_weights=True)
    except Exception:
        # Fallback: identical kernel with default double-buffered weight blocks (only
        # hit if this jax build rejects pipeline_mode=pl.Buffered(1) on TPU).
        out_pad = _fused_call(x_pad, padded_params, TB, x2d.dtype,
                              single_buffer_weights=False)

    return out_pad[:B, :num_classes]


def mlp_reference(x, params):
    # Pure-JAX f32 reference for correctness checking (unpadded math).
    x = x.reshape(x.shape[0], -1).astype(jnp.float32)
    for w_t, b in params:
        x = jnp.maximum(x @ w_t + b, 0.0)
    return x


if __name__ == "__main__":
    key = jax.random.PRNGKey(0)
    key, xk, pk = jax.random.split(key, 3)

    # hidden_layer_sizes=(64, 32), num_classes=8; input (2, 4, 4, 4) flattens to (2, 64).
    hidden_layer_sizes = (64, 32)
    num_classes = 8
    x = jax.random.normal(xk, (2, 4, 4, 4), dtype=jnp.float32)

    params = init_mlp_params(pk, hidden_layer_sizes, num_classes)
    padded_params = pad_mlp_params(params)          # bf16 weights, f32 biases

    out = mlp_forward(x, params, padded_params)
    out = jax.block_until_ready(out)

    ref = mlp_reference(x, params)
    assert out.shape == (2, num_classes), out.shape
    # bf16 MXU operands (f32 accumulation) vs. pure-f32 reference -> loose tolerance.
    assert jnp.allclose(out, ref, atol=2e-2, rtol=2e-2), "mismatch vs reference"

    print("KERNEL_OK")
</pallas_src>

<mosaic_0001>
module attributes {stable_mosaic.version = 11 : i64} {
  func.func @_mlp_fused_kernel(%arg0: i32, %arg1: memref<8x128xf32, #tpu.memory_space<vmem>>, %arg2: memref<128x128xbf16, #tpu.memory_space<vmem>>, %arg3: memref<1x128xf32, #tpu.memory_space<vmem>>, %arg4: memref<128x128xbf16, #tpu.memory_space<vmem>>, %arg5: memref<1x128xf32, #tpu.memory_space<vmem>>, %arg6: memref<8x128xf32, #tpu.memory_space<vmem>>) attributes {dimension_semantics = [#tpu.dimension_semantics<parallel>], iteration_bounds = array<i64: 1>, scalar_prefetch = 0 : i64, scratch_operands = 0 : i64, tpu.core_type = #tpu.core_type<tc>, window_params = [{transform_indices = @transform_0, window_bounds = array<i64: 8, 128>}, {pipeline_mode = #tpu.pipeline_mode<synchronous>, transform_indices = @transform_1, window_bounds = array<i64: 128, 128>}, {pipeline_mode = #tpu.pipeline_mode<synchronous>, transform_indices = @transform_2, window_bounds = array<i64: 1, 128>}, {pipeline_mode = #tpu.pipeline_mode<synchronous>, transform_indices = @transform_3, window_bounds = array<i64: 128, 128>}, {pipeline_mode = #tpu.pipeline_mode<synchronous>, transform_indices = @transform_4, window_bounds = array<i64: 1, 128>}, {transform_indices = @transform_5, window_bounds = array<i64: 8, 128>}]} {
    %c0 = arith.constant 0 : index
    %c0_0 = arith.constant 0 : index
    %0 = vector.load %arg1[%c0, %c0_0] : memref<8x128xf32, #tpu.memory_space<vmem>>, vector<8x128xf32>
    %c0_1 = arith.constant 0 : index
    %c0_2 = arith.constant 0 : index
    %1 = vector.load %arg2[%c0_1, %c0_2] : memref<128x128xbf16, #tpu.memory_space<vmem>>, vector<128x128xbf16>
    %c0_3 = arith.constant 0 : index
    %c0_4 = arith.constant 0 : index
    %2 = vector.load %arg3[%c0_3, %c0_4] : memref<1x128xf32, #tpu.memory_space<vmem>>, vector<1x128xf32>
    %3 = arith.truncf %0 : vector<8x128xf32> to vector<8x128xbf16>
    %cst = arith.constant dense<0.000000e+00> : vector<8x128xf32>
    %4 = tpu.matmul %3, %1, %cst {dimension_numbers = #tpu.dot_dimension_numbers<[1], [0], [0], [1], [0, 0, 1, 1], [], []>} : vector<8x128xbf16>, vector<128x128xbf16>, vector<8x128xf32> -> vector<8x128xf32>
    %5 = vector.broadcast %2 : vector<1x128xf32> to vector<8x128xf32>
    %6 = arith.addf %4, %5 : vector<8x128xf32>
    %cst_5 = arith.constant 0.000000e+00 : f32
    %7 = vector.broadcast %cst_5 : f32 to vector<8x128xf32>
    %8 = arith.maximumf %6, %7 : vector<8x128xf32>
    %c0_6 = arith.constant 0 : index
    %c0_7 = arith.constant 0 : index
    %9 = vector.load %arg4[%c0_6, %c0_7] : memref<128x128xbf16, #tpu.memory_space<vmem>>, vector<128x128xbf16>
    %c0_8 = arith.constant 0 : index
    %c0_9 = arith.constant 0 : index
    %10 = vector.load %arg5[%c0_8, %c0_9] : memref<1x128xf32, #tpu.memory_space<vmem>>, vector<1x128xf32>
    %11 = arith.truncf %8 : vector<8x128xf32> to vector<8x128xbf16>
    %cst_10 = arith.constant dense<0.000000e+00> : vector<8x128xf32>
    %12 = tpu.matmul %11, %9, %cst_10 {dimension_numbers = #tpu.dot_dimension_numbers<[1], [0], [0], [1], [0, 0, 1, 1], [], []>} : vector<8x128xbf16>, vector<128x128xbf16>, vector<8x128xf32> -> vector<8x128xf32>
    %13 = vector.broadcast %10 : vector<1x128xf32> to vector<8x128xf32>
    %14 = arith.addf %12, %13 : vector<8x128xf32>
    %cst_11 = arith.constant 0.000000e+00 : f32
    %15 = vector.broadcast %cst_11 : f32 to vector<8x128xf32>
    %16 = arith.maximumf %14, %15 : vector<8x128xf32>
    %c0_12 = arith.constant 0 : index
    %c0_13 = arith.constant 0 : index
    %17 = vector.load %arg6[%c0_12, %c0_13] : memref<8x128xf32, #tpu.memory_space<vmem>>, vector<8x128xf32>
    tpu.vector_store %arg6[%c0_12, %c0_13], %16 {strides = array<i32>} : memref<8x128xf32, #tpu.memory_space<vmem>>, vector<8x128xf32>,
    return
  }
  func.func @transform_0(%arg0: i32) -> (i32, i32) {
    %c0_i32 = arith.constant 0 : i32
    %c0_i32_0 = arith.constant 0 : i32
    return %arg0, %c0_i32 : i32, i32
  }
  func.func @transform_1(%arg0: i32) -> (i32, i32) {
    %c0_i32 = arith.constant 0 : i32
    %c0_i32_0 = arith.constant 0 : i32
    %c0_i32_1 = arith.constant 0 : i32
    return %c0_i32, %c0_i32_0 : i32, i32
  }
  func.func @transform_2(%arg0: i32) -> (i32, i32) {
    %c0_i32 = arith.constant 0 : i32
    %c0_i32_0 = arith.constant 0 : i32
    %c0_i32_1 = arith.constant 0 : i32
    return %c0_i32, %c0_i32_0 : i32, i32
  }
  func.func @transform_3(%arg0: i32) -> (i32, i32) {
    %c0_i32 = arith.constant 0 : i32
    %c0_i32_0 = arith.constant 0 : i32
    %c0_i32_1 = arith.constant 0 : i32
    return %c0_i32, %c0_i32_0 : i32, i32
  }
  func.func @transform_4(%arg0: i32) -> (i32, i32) {
    %c0_i32 = arith.constant 0 : i32
    %c0_i32_0 = arith.constant 0 : i32
    %c0_i32_1 = arith.constant 0 : i32
    return %c0_i32, %c0_i32_0 : i32, i32
  }
  func.func @transform_5(%arg0: i32) -> (i32, i32) {
    %c0_i32 = arith.constant 0 : i32
    %c0_i32_0 = arith.constant 0 : i32
    return %arg0, %c0_i32 : i32, i32
  }
}

module attributes {stable_mosaic.version = 11 : i64} {
  func.func @_mlp_fused_kernel(%arg0: i32, %arg1: memref<8x128xf32, #tpu.memory_space<vmem>>, %arg2: memref<128x128xbf16, #tpu.memory_space<vmem>>, %arg3: memref<1x128xf32, #tpu.memory_space<vmem>>, %arg4: memref<128x128xbf16, #tpu.memory_space<vmem>>, %arg5: memref<1x128xf32, #tpu.memory_space<vmem>>, %arg6: memref<8x128xf32, #tpu.memory_space<vmem>>) attributes {dimension_semantics = [#tpu.dimension_semantics<parallel>], iteration_bounds = array<i64: 1>, scalar_prefetch = 0 : i64, scratch_operands = 0 : i64, tpu.core_type = #tpu.core_type<tc>, window_params = [{transform_indices = @transform_0, window_bounds = array<i64: 8, 128>}, {pipeline_mode = #tpu.pipeline_mode<synchronous>, transform_indices = @transform_1, window_bounds = array<i64: 128, 128>}, {pipeline_mode = #tpu.pipeline_mode<synchronous>, transform_indices = @transform_2, window_bounds = array<i64: 1, 128>}, {pipeline_mode = #tpu.pipeline_mode<synchronous>, transform_indices = @transform_3, window_bounds = array<i64: 128, 128>}, {pipeline_mode = #tpu.pipeline_mode<synchronous>, transform_indices = @transform_4, window_bounds = array<i64: 1, 128>}, {transform_indices = @transform_5, window_bounds = array<i64: 8, 128>}]} {
    %c0 = arith.constant 0 : index
    %c0_0 = arith.constant 0 : index
    %0 = vector.load %arg1[%c0, %c0_0] : memref<8x128xf32, #tpu.memory_space<vmem>>, vector<8x128xf32>
    %c0_1 = arith.constant 0 : index
    %c0_2 = arith.constant 0 : index
    %1 = vector.load %arg2[%c0_1, %c0_2] : memref<128x128xbf16, #tpu.memory_space<vmem>>, vector<128x128xbf16>
    %c0_3 = arith.constant 0 : index
    %c0_4 = arith.constant 0 : index
    %2 = vector.load %arg3[%c0_3, %c0_4] : memref<1x128xf32, #tpu.memory_space<vmem>>, vector<1x128xf32>
    %3 = arith.truncf %0 : vector<8x128xf32> to vector<8x128xbf16>
    %cst = arith.constant dense<0.000000e+00> : vector<8x128xf32>
    %4 = tpu.matmul %3, %1, %cst {dimension_numbers = #tpu.dot_dimension_numbers<[1], [0], [0], [1], [0, 0, 1, 1], [], []>} : vector<8x128xbf16>, vector<128x128xbf16>, vector<8x128xf32> -> vector<8x128xf32>
    %5 = vector.broadcast %2 : vector<1x128xf32> to vector<8x128xf32>
    %6 = arith.addf %4, %5 : vector<8x128xf32>
    %cst_5 = arith.constant 0.000000e+00 : f32
    %7 = vector.broadcast %cst_5 : f32 to vector<8x128xf32>
    %8 = arith.maximumf %6, %7 : vector<8x128xf32>
    %c0_6 = arith.constant 0 : index
    %c0_7 = arith.constant 0 : index
    %9 = vector.load %arg4[%c0_6, %c0_7] : memref<128x128xbf16, #tpu.memory_space<vmem>>, vector<128x128xbf16>
    %c0_8 = arith.constant 0 : index
    %c0_9 = arith.constant 0 : index
    %10 = vector.load %arg5[%c0_8, %c0_9] : memref<1x128xf32, #tpu.memory_space<vmem>>, vector<1x128xf32>
    %11 = arith.truncf %8 : vector<8x128xf32> to vector<8x128xbf16>
    %cst_10 = arith.constant dense<0.000000e+00> : vector<8x128xf32>
    %12 = tpu.matmul %11, %9, %cst_10 {dimension_numbers = #tpu.dot_dimension_numbers<[1], [0], [0], [1], [0, 0, 1, 1], [], []>} : vector<8x128xbf16>, vector<128x128xbf16>, vector<8x128xf32> -> vector<8x128xf32>
    %13 = vector.broadcast %10 : vector<1x128xf32> to vector<8x128xf32>
    %14 = arith.addf %12, %13 : vector<8x128xf32>
    %cst_11 = arith.constant 0.000000e+00 : f32
    %15 = vector.broadcast %cst_11 : f32 to vector<8x128xf32>
    %16 = arith.maximumf %14, %15 : vector<8x128xf32>
    %c0_12 = arith.constant 0 : index
    %c0_13 = arith.constant 0 : index
    %17 = vector.load %arg6[%c0_12, %c0_13] : memref<8x128xf32, #tpu.memory_space<vmem>>, vector<8x128xf32>
    tpu.vector_store %arg6[%c0_12, %c0_13], %16 {strides = array<i32>} : memref<8x128xf32, #tpu.memory_space<vmem>>, vector<8x128xf32>,
    return
  }
  func.func @transform_0(%arg0: i32) -> (i32, i32) {
    %c0_i32 = arith.constant 0 : i32
    %c0_i32_0 = arith.constant 0 : i32
    return %arg0, %c0_i32 : i32, i32
  }
  func.func @transform_1(%arg0: i32) -> (i32, i32) {
    %c0_i32 = arith.constant 0 : i32
    %c0_i32_0 = arith.constant 0 : i32
    %c0_i32_1 = arith.constant 0 : i32
    return %c0_i32, %c0_i32_0 : i32, i32
  }
  func.func @transform_2(%arg0: i32) -> (i32, i32) {
    %c0_i32 = arith.constant 0 : i32
    %c0_i32_0 = arith.constant 0 : i32
    %c0_i32_1 = arith.constant 0 : i32
    return %c0_i32, %c0_i32_0 : i32, i32
  }
  func.func @transform_3(%arg0: i32) -> (i32, i32) {
    %c0_i32 = arith.constant 0 : i32
    %c0_i32_0 = arith.constant 0 : i32
    %c0_i32_1 = arith.constant 0 : i32
    return %c0_i32, %c0_i32_0 : i32, i32
  }
  func.func @transform_4(%arg0: i32) -> (i32, i32) {
    %c0_i32 = arith.constant 0 : i32
    %c0_i32_0 = arith.constant 0 : i32
    %c0_i32_1 = arith.constant 0 : i32
    return %c0_i32, %c0_i32_0 : i32, i32
  }
  func.func @transform_5(%arg0: i32) -> (i32, i32) {
    %c0_i32 = arith.constant 0 : i32
    %c0_i32_0 = arith.constant 0 : i32
    return %arg0, %c0_i32 : i32, i32
  }
}

</mosaic_0001>

<llo_original>
// kernel: tpu_custom_call.1
$region0: #{tpu_custom_call.1}
  #allocation0 [shape = 'u32[]', space=smem, size = 0x4, offset = 0x4, fixed_abs, tag = 'smem constant byte address 0x4 - core index']
  #allocation1 [shape = 'u32[72,128]{1,0:T(1,128)}', space=vmem, size = 0x9000, scoped, tag = 'internal scratch']
  %s0 = inlined_call_operand.hbm [shape: f32[8,128], index: 0, kind: input, shape index: {}]
  %s1 = inlined_call_operand.hbm [shape: bf16[128,128], index: 1, kind: input, shape index: {}]
  %s2 = inlined_call_operand.vmem [shape: f32[1,128], index: 2, kind: input, shape index: {}]
  %s3 = inlined_call_operand.hbm [shape: bf16[128,128], index: 3, kind: input, shape index: {}]
  %s4 = inlined_call_operand.vmem [shape: f32[1,128], index: 4, kind: input, shape index: {}]
  %s5 = inlined_call_operand.hbm [shape: f32[8,128], index: 5, kind: output, shape index: {}]
  %s6 = sld [smem:[#allocation0]]
  $region42: #{tpu_custom_call.1} parent=0
    _
  %s8 = ssub.s32 1, %s6
  %s9 = scalar_select 0, %s8, %s6
  $region1: #{tpu_custom_call.1} parent=0
    #allocation2 [shape = 'u8[4096]{0}', space=vmem, size = 0x1000, scoped, tag = 'input window, operand 0, single buffered']
    #allocation3 [shape = 's32[1]{0}', space=sflag, size = 0x4, scoped, tag = 'scoped memory for tpu_custom_call.1']
    #allocation4 [shape = 's32[1]{0}', space=sflag, size = 0x4, scoped, tag = 'scoped memory for tpu_custom_call.1']
    #allocation5 [shape = 'u8[32768]{0}', space=vmem, size = 0x8000, scoped, tag = 'input window, operand 1, single buffered']
    #allocation6 [shape = 's32[1]{0}', space=sflag, size = 0x4, scoped, tag = 'scoped memory for tpu_custom_call.1']
    #allocation7 [shape = 'u8[32768]{0}', space=vmem, size = 0x8000, scoped, tag = 'input window, operand 3, single buffered']
    #allocation8 [shape = 'u8[4096]{0}', space=vmem, size = 0x1000, scoped, tag = 'output window, operand 0, single buffered']
    %10 = vsyncpa [#allocation3], 0
    %11 = vsyncpa [#allocation6], 0
    %12 = vsyncpa [#allocation4], 0
    // Predicated region
    $region2: #{tpu_custom_call.1} parent=1 // pred_check
      _
    $region3: #{tpu_custom_call.1} parent=1 // pred_check_branch
      %14 = sbr.rel (0) target = $region5
    $region4: #{tpu_custom_call.1} parent=1 // pred_region
      %16 = vsyncadd [#allocation3], 0
      %s18 = sshll.u32 %s0, 4
      %s19 = int_to_ptr.hbm [resolvable:$true] %s18
      %s20 = sshll.u32 [#allocation2], 4
      %s21 = int_to_ptr.vmem [resolvable:$true] %s20
      %23 = dma.hbm_to_vmem [thread:$0]  %s19, 128, %s21, [#allocation3]
    $region5: #{tpu_custom_call.1} parent=1 // pred_fallthru
      _
    // Predicated region
    $region6: #{tpu_custom_call.1} parent=1 // pred_check
      _
    $region7: #{tpu_custom_call.1} parent=1 // pred_check_branch
      %25 = sbr.rel (0) target = $region9
    $region8: #{tpu_custom_call.1} parent=1 // pred_region
      %27 = vsyncadd [#allocation6], 0
      %s28 = sshll.u32 %s1, 4
      %s29 = int_to_ptr.hbm [resolvable:$true] %s28
      %s30 = sshll.u32 [#allocation5], 4
      %s31 = int_to_ptr.vmem [resolvable:$true] %s30
      %36 = dma.hbm_to_vmem [thread:$0]  %s29, 1024, %s31, [#allocation6], 64, 64, 4
    $region9: #{tpu_custom_call.1} parent=1 // pred_fallthru
      _
    // Predicated region
    $region10: #{tpu_custom_call.1} parent=1 // pred_check
      _
    $region11: #{tpu_custom_call.1} parent=1 // pred_check_branch
      %38 = sbr.rel (0) target = $region13
    $region12: #{tpu_custom_call.1} parent=1 // pred_region
      _
    $region13: #{tpu_custom_call.1} parent=1 // pred_fallthru
      _
    // Predicated region
    $region14: #{tpu_custom_call.1} parent=1 // pred_check
      _
    $region15: #{tpu_custom_call.1} parent=1 // pred_check_branch
      %40 = sbr.rel (0) target = $region17
    $region16: #{tpu_custom_call.1} parent=1 // pred_region
      %42 = vsyncadd [#allocation6], 0
      %s43 = sshll.u32 %s3, 4
      %s44 = int_to_ptr.hbm [resolvable:$true] %s43
      %s45 = sshll.u32 [#allocation7], 4
      %s46 = int_to_ptr.vmem [resolvable:$true] %s45
      %51 = dma.hbm_to_vmem [thread:$0]  %s44, 1024, %s46, [#allocation6], 64, 64, 4
    $region17: #{tpu_custom_call.1} parent=1 // pred_fallthru
      _
    // Predicated region
    $region18: #{tpu_custom_call.1} parent=1 // pred_check
      _
    $region19: #{tpu_custom_call.1} parent=1 // pred_check_branch
      %53 = sbr.rel (0) target = $region21
    $region20: #{tpu_custom_call.1} parent=1 // pred_region
      _
    $region21: #{tpu_custom_call.1} parent=1 // pred_fallthru
      _
    // Predicated region
    $region22: #{tpu_custom_call.1} parent=1 // pred_check
      _
    $region23: #{tpu_custom_call.1} parent=1 // pred_check_branch
      %55 = sbr.rel (0) target = $region25
    $region24: #{tpu_custom_call.1} parent=1 // pred_region
      %57 = dma.done [#allocation3], 128
    $region25: #{tpu_custom_call.1} parent=1 // pred_fallthru
      _
    // Predicated region
    $region26: #{tpu_custom_call.1} parent=1 // pred_check
      _
    $region27: #{tpu_custom_call.1} parent=1 // pred_check_branch
      %59 = sbr.rel (0) target = $region29
    $region28: #{tpu_custom_call.1} parent=1 // pred_region
      %61 = dma.done [#allocation6], 1024
    $region29: #{tpu_custom_call.1} parent=1 // pred_fallthru
      _
    // Predicated region
    $region30: #{tpu_custom_call.1} parent=1 // pred_check
      _
    $region31: #{tpu_custom_call.1} parent=1 // pred_check_branch
      %63 = sbr.rel (0) target = $region33
    $region32: #{tpu_custom_call.1} parent=1 // pred_region
      %65 = dma.done [#allocation6], 1024
    $region33: #{tpu_custom_call.1} parent=1 // pred_fallthru
      _
    %v66 = vld [vmem:[#allocation2] sm:$0xff]
    %v67 = vld [vmem:[#allocation5] sm:$0xf]
    %v68 = vld [vmem:[#allocation5 + $0x4] sm:$0xf]
    %v69 = vld [vmem:[#allocation5 + $0x8] sm:$0xf]
    %v70 = vld [vmem:[#allocation5 + $0xc] sm:$0xf]
    %v71 = vld [vmem:[#allocation5 + $0x10] sm:$0xf]
    %v72 = vld [vmem:[#allocation5 + $0x14] sm:$0xf]
    %v73 = vld [vmem:[#allocation5 + $0x18] sm:$0xf]
    %v74 = vld [vmem:[#allocation5 + $0x1c] sm:$0xf]
    %v75 = vld [vmem:[#allocation5 + $0x20] sm:$0xf]
    %v76 = vld [vmem:[#allocation5 + $0x24] sm:$0xf]
    %v77 = vld [vmem:[#allocation5 + $0x28] sm:$0xf]
    %v78 = vld [vmem:[#allocation5 + $0x2c] sm:$0xf]
    %v79 = vld [vmem:[#allocation5 + $0x30] sm:$0xf]
    %v80 = vld [vmem:[#allocation5 + $0x34] sm:$0xf]
    %v81 = vld [vmem:[#allocation5 + $0x38] sm:$0xf]
    %v82 = vld [vmem:[#allocation5 + $0x3c] sm:$0xf]
    %v83 = vld [vmem:[%s2] sm:$0x1]
    %v84 = vpack.c.bf16 %v66, %v66
    %v86 = vperm.slane %v83, 0
    %v104 = vunpack.c.l.b16 %v67
    %v105 = vunpack.c.l.b16 %v68
    %v106 = vunpack.c.l.b16 %v69
    %v107 = vunpack.c.l.b16 %v70
    %v108 = vunpack.c.l.b16 %v71
    %v109 = vunpack.c.l.b16 %v72
    %v110 = vunpack.c.l.b16 %v73
    %v111 = vunpack.c.l.b16 %v74
    %v112 = vunpack.c.l.b16 %v75
    %v113 = vunpack.c.l.b16 %v76
    %v114 = vunpack.c.l.b16 %v77
    %v115 = vunpack.c.l.b16 %v78
    %v116 = vunpack.c.l.b16 %v79
    %v117 = vunpack.c.l.b16 %v80
    %v118 = vunpack.c.l.b16 %v81
    %v119 = vunpack.c.l.b16 %v82
    %v120 = vpack.c.b16 %v105, %v104
    %v121 = vpack.c.b16 %v107, %v106
    %v122 = vpack.c.b16 %v109, %v108
    %v123 = vpack.c.b16 %v111, %v110
    %v124 = vpack.c.b16 %v113, %v112
    %v125 = vpack.c.b16 %v115, %v114
    %v126 = vpack.c.b16 %v117, %v116
    %v127 = vpack.c.b16 %v119, %v118
    %136 = vmatpush.bf16.msra.mxu0 %v127
    %137 = vmatpush.bf16.msra.mxu0 %v126
    %138 = vmatpush.bf16.msra.mxu0 %v125
    %139 = vmatpush.bf16.msra.mxu0 %v124
    %140 = vmatpush.bf16.msra.mxu0 %v123
    %141 = vmatpush.bf16.msra.mxu0 %v122
    %142 = vmatpush.bf16.msra.mxu0 %v121
    %143 = vmatpush.bf16.msra.mxu0 %v120
    %144 = vmatmul.bf16.gmra.mxu0 %v84
    %v145 = vpop.f32.mrf.mxu0
    %v146 = vadd.f32 %v86, %v145
    %v147 = vpop.f32.mrf.mxu0
    %148 = vdwg.mxu0
    %v149 = vmax.f32 %v146, 0.0
    %v150 = vld [vmem:[#allocation7] sm:$0xf]
    %v151 = vld [vmem:[#allocation7 + $0x4] sm:$0xf]
    %v152 = vld [vmem:[#allocation7 + $0x8] sm:$0xf]
    %v153 = vld [vmem:[#allocation7 + $0xc] sm:$0xf]
    %v154 = vld [vmem:[#allocation7 + $0x10] sm:$0xf]
    %v155 = vld [vmem:[#allocation7 + $0x14] sm:$0xf]
    %v156 = vld [vmem:[#allocation7 + $0x18] sm:$0xf]
    %v157 = vld [vmem:[#allocation7 + $0x1c] sm:$0xf]
    %v158 = vld [vmem:[#allocation7 + $0x20] sm:$0xf]
    %v159 = vld [vmem:[#allocation7 + $0x24] sm:$0xf]
    %v160 = vld [vmem:[#allocation7 + $0x28] sm:$0xf]
    %v161 = vld [vmem:[#allocation7 + $0x2c] sm:$0xf]
    %v162 = vld [vmem:[#allocation7 + $0x30] sm:$0xf]
    %v163 = vld [vmem:[#allocation7 + $0x34] sm:$0xf]
    %v164 = vld [vmem:[#allocation7 + $0x38] sm:$0xf]
    %v165 = vld [vmem:[#allocation7 + $0x3c] sm:$0xf]
    %v166 = vld [vmem:[%s4] sm:$0x1]
    %v167 = vpack.c.bf16 %v149, %v149
    %v169 = vperm.slane %v166, 0
    %v187 = vunpack.c.l.b16 %v150
    %v188 = vunpack.c.l.b16 %v151
    %v189 = vunpack.c.l.b16 %v152
    %v190 = vunpack.c.l.b16 %v153
    %v191 = vunpack.c.l.b16 %v154
    %v192 = vunpack.c.l.b16 %v155
    %v193 = vunpack.c.l.b16 %v156
    %v194 = vunpack.c.l.b16 %v157
    %v195 = vunpack.c.l.b16 %v158
    %v196 = vunpack.c.l.b16 %v159
    %v197 = vunpack.c.l.b16 %v160
    %v198 = vunpack.c.l.b16 %v161
    %v199 = vunpack.c.l.b16 %v162
    %v200 = vunpack.c.l.b16 %v163
    %v201 = vunpack.c.l.b16 %v164
    %v202 = vunpack.c.l.b16 %v165
    %v203 = vpack.c.b16 %v188, %v187
    %v204 = vpack.c.b16 %v190, %v189
    %v205 = vpack.c.b16 %v192, %v191
    %v206 = vpack.c.b16 %v194, %v193
    %v207 = vpack.c.b16 %v196, %v195
    %v208 = vpack.c.b16 %v198, %v197
    %v209 = vpack.c.b16 %v200, %v199
    %v210 = vpack.c.b16 %v202, %v201
    %219 = vmatpush.bf16.msra.mxu0 %v210
    %220 = vmatpush.bf16.msra.mxu0 %v209
    %221 = vmatpush.bf16.msra.mxu0 %v208
    %222 = vmatpush.bf16.msra.mxu0 %v207
    %223 = vmatpush.bf16.msra.mxu0 %v206
    %224 = vmatpush.bf16.msra.mxu0 %v205
    %225 = vmatpush.bf16.msra.mxu0 %v204
    %226 = vmatpush.bf16.msra.mxu0 %v203
    %227 = vmatmul.bf16.gmra.mxu0 %v167
    %v228 = vpop.f32.mrf.mxu0
    %v229 = vadd.f32 %v169, %v228
    %v230 = vpop.f32.mrf.mxu0
    %231 = vdwg.mxu0
    %v232 = vmax.f32 %v229, 0.0
    %233 = vst [vmem:[#allocation8] sm:$0xff] %v232
    // Predicated region
    $region34: #{tpu_custom_call.1} parent=1 // pred_check
      _
    $region35: #{tpu_custom_call.1} parent=1 // pred_check_branch
      %235 = sbr.rel (0) target = $region37
    $region36: #{tpu_custom_call.1} parent=1 // pred_region
      %237 = vsyncadd [#allocation4], 0
      %s239 = sshll.u32 [#allocation8], 4
      %s240 = int_to_ptr.vmem [resolvable:$true] %s239
      %s241 = sshll.u32 %s5, 4
      %s242 = int_to_ptr.hbm [resolvable:$true] %s241
      %244 = dma.vmem_to_hbm [thread:$0]  %s240, 128, %s242, [#allocation4]
    $region37: #{tpu_custom_call.1} parent=1 // pred_fallthru
      _
    // Predicated region
    $region38: #{tpu_custom_call.1} parent=1 // pred_check
      _
    $region39: #{tpu_custom_call.1} parent=1 // pred_check_branch
      %246 = sbr.rel (0) target = $region41
    $region40: #{tpu_custom_call.1} parent=1 // pred_region
      %248 = dma.done [#allocation4], 128
    $region41: #{tpu_custom_call.1} parent=1 // pred_fallthru
      _
    %249 = vsyncpa [#allocation3], 1
    %250 = vsyncpa [#allocation6], 1
    %251 = vsyncpa [#allocation4], 1

// kernel: tpu_custom_call.1
$region0: #{tpu_custom_call.1}
  #allocation0 [shape = 'u32[]', space=smem, size = 0x4, offset = 0x4, fixed_abs, tag = 'smem constant byte address 0x4 - core index']
  #allocation1 [shape = 'u32[72,128]{1,0:T(1,128)}', space=vmem, size = 0x9000, scoped, tag = 'internal scratch']
  %s0 = inlined_call_operand.hbm [shape: f32[8,128], index: 0, kind: input, shape index: {}]
  %s1 = inlined_call_operand.hbm [shape: bf16[128,128], index: 1, kind: input, shape index: {}]
  %s2 = inlined_call_operand.vmem [shape: f32[1,128], index: 2, kind: input, shape index: {}]
  %s3 = inlined_call_operand.hbm [shape: bf16[128,128], index: 3, kind: input, shape index: {}]
  %s4 = inlined_call_operand.vmem [shape: f32[1,128], index: 4, kind: input, shape index: {}]
  %s5 = inlined_call_operand.hbm [shape: f32[8,128], index: 5, kind: output, shape index: {}]
  %s6 = sld [smem:[#allocation0]]
  $region42: #{tpu_custom_call.1} parent=0
    _
  %s8 = ssub.s32 1, %s6
  %s9 = scalar_select 0, %s8, %s6
  $region1: #{tpu_custom_call.1} parent=0
    #allocation2 [shape = 'u8[4096]{0}', space=vmem, size = 0x1000, scoped, tag = 'input window, operand 0, single buffered']
    #allocation3 [shape = 's32[1]{0}', space=sflag, size = 0x4, scoped, tag = 'scoped memory for tpu_custom_call.1']
    #allocation4 [shape = 's32[1]{0}', space=sflag, size = 0x4, scoped, tag = 'scoped memory for tpu_custom_call.1']
    #allocation5 [shape = 'u8[32768]{0}', space=vmem, size = 0x8000, scoped, tag = 'input window, operand 1, single buffered']
    #allocation6 [shape = 's32[1]{0}', space=sflag, size = 0x4, scoped, tag = 'scoped memory for tpu_custom_call.1']
    #allocation7 [shape = 'u8[32768]{0}', space=vmem, size = 0x8000, scoped, tag = 'input window, operand 3, single buffered']
    #allocation8 [shape = 'u8[4096]{0}', space=vmem, size = 0x1000, scoped, tag = 'output window, operand 0, single buffered']
    %10 = vsyncpa [#allocation3], 0
    %11 = vsyncpa [#allocation6], 0
    %12 = vsyncpa [#allocation4], 0
    // Predicated region
    $region2: #{tpu_custom_call.1} parent=1 // pred_check
      _
    $region3: #{tpu_custom_call.1} parent=1 // pred_check_branch
      %14 = sbr.rel (0) target = $region5
    $region4: #{tpu_custom_call.1} parent=1 // pred_region
      %16 = vsyncadd [#allocation3], 0
      %s18 = sshll.u32 %s0, 4
      %s19 = int_to_ptr.hbm [resolvable:$true] %s18
      %s20 = sshll.u32 [#allocation2], 4
      %s21 = int_to_ptr.vmem [resolvable:$true] %s20
      %23 = dma.hbm_to_vmem [thread:$0]  %s19, 128, %s21, [#allocation3]
    $region5: #{tpu_custom_call.1} parent=1 // pred_fallthru
      _
    // Predicated region
    $region6: #{tpu_custom_call.1} parent=1 // pred_check
      _
    $region7: #{tpu_custom_call.1} parent=1 // pred_check_branch
      %25 = sbr.rel (0) target = $region9
    $region8: #{tpu_custom_call.1} parent=1 // pred_region
      %27 = vsyncadd [#allocation6], 0
      %s28 = sshll.u32 %s1, 4
      %s29 = int_to_ptr.hbm [resolvable:$true] %s28
      %s30 = sshll.u32 [#allocation5], 4
      %s31 = int_to_ptr.vmem [resolvable:$true] %s30
      %36 = dma.hbm_to_vmem [thread:$0]  %s29, 1024, %s31, [#allocation6], 64, 64, 4
    $region9: #{tpu_custom_call.1} parent=1 // pred_fallthru
      _
    // Predicated region
    $region10: #{tpu_custom_call.1} parent=1 // pred_check
      _
    $region11: #{tpu_custom_call.1} parent=1 // pred_check_branch
      %38 = sbr.rel (0) target = $region13
    $region12: #{tpu_custom_call.1} parent=1 // pred_region
      _
    $region13: #{tpu_custom_call.1} parent=1 // pred_fallthru
      _
    // Predicated region
    $region14: #{tpu_custom_call.1} parent=1 // pred_check
      _
    $region15: #{tpu_custom_call.1} parent=1 // pred_check_branch
      %40 = sbr.rel (0) target = $region17
    $region16: #{tpu_custom_call.1} parent=1 // pred_region
      %42 = vsyncadd [#allocation6], 0
      %s43 = sshll.u32 %s3, 4
      %s44 = int_to_ptr.hbm [resolvable:$true] %s43
      %s45 = sshll.u32 [#allocation7], 4
      %s46 = int_to_ptr.vmem [resolvable:$true] %s45
      %51 = dma.hbm_to_vmem [thread:$0]  %s44, 1024, %s46, [#allocation6], 64, 64, 4
    $region17: #{tpu_custom_call.1} parent=1 // pred_fallthru
      _
    // Predicated region
    $region18: #{tpu_custom_call.1} parent=1 // pred_check
      _
    $region19: #{tpu_custom_call.1} parent=1 // pred_check_branch
      %53 = sbr.rel (0) target = $region21
    $region20: #{tpu_custom_call.1} parent=1 // pred_region
      _
    $region21: #{tpu_custom_call.1} parent=1 // pred_fallthru
      _
    // Predicated region
    $region22: #{tpu_custom_call.1} parent=1 // pred_check
      _
    $region23: #{tpu_custom_call.1} parent=1 // pred_check_branch
      %55 = sbr.rel (0) target = $region25
    $region24: #{tpu_custom_call.1} parent=1 // pred_region
      %57 = dma.done [#allocation3], 128
    $region25: #{tpu_custom_call.1} parent=1 // pred_fallthru
      _
    // Predicated region
    $region26: #{tpu_custom_call.1} parent=1 // pred_check
      _
    $region27: #{tpu_custom_call.1} parent=1 // pred_check_branch
      %59 = sbr.rel (0) target = $region29
    $region28: #{tpu_custom_call.1} parent=1 // pred_region
      %61 = dma.done [#allocation6], 1024
    $region29: #{tpu_custom_call.1} parent=1 // pred_fallthru
      _
    // Predicated region
    $region30: #{tpu_custom_call.1} parent=1 // pred_check
      _
    $region31: #{tpu_custom_call.1} parent=1 // pred_check_branch
      %63 = sbr.rel (0) target = $region33
    $region32: #{tpu_custom_call.1} parent=1 // pred_region
      %65 = dma.done [#allocation6], 1024
    $region33: #{tpu_custom_call.1} parent=1 // pred_fallthru
      _
    %v66 = vld [vmem:[#allocation2] sm:$0xff]
    %v67 = vld [vmem:[#allocation5] sm:$0xf]
    %v68 = vld [vmem:[#allocation5 + $0x4] sm:$0xf]
    %v69 = vld [vmem:[#allocation5 + $0x8] sm:$0xf]
    %v70 = vld [vmem:[#allocation5 + $0xc] sm:$0xf]
    %v71 = vld [vmem:[#allocation5 + $0x10] sm:$0xf]
    %v72 = vld [vmem:[#allocation5 + $0x14] sm:$0xf]
    %v73 = vld [vmem:[#allocation5 + $0x18] sm:$0xf]
    %v74 = vld [vmem:[#allocation5 + $0x1c] sm:$0xf]
    %v75 = vld [vmem:[#allocation5 + $0x20] sm:$0xf]
    %v76 = vld [vmem:[#allocation5 + $0x24] sm:$0xf]
    %v77 = vld [vmem:[#allocation5 + $0x28] sm:$0xf]
    %v78 = vld [vmem:[#allocation5 + $0x2c] sm:$0xf]
    %v79 = vld [vmem:[#allocation5 + $0x30] sm:$0xf]
    %v80 = vld [vmem:[#allocation5 + $0x34] sm:$0xf]
    %v81 = vld [vmem:[#allocation5 + $0x38] sm:$0xf]
    %v82 = vld [vmem:[#allocation5 + $0x3c] sm:$0xf]
    %v83 = vld [vmem:[%s2] sm:$0x1]
    %v84 = vpack.c.bf16 %v66, %v66
    %v86 = vperm.slane %v83, 0
    %v104 = vunpack.c.l.b16 %v67
    %v105 = vunpack.c.l.b16 %v68
    %v106 = vunpack.c.l.b16 %v69
    %v107 = vunpack.c.l.b16 %v70
    %v108 = vunpack.c.l.b16 %v71
    %v109 = vunpack.c.l.b16 %v72
    %v110 = vunpack.c.l.b16 %v73
    %v111 = vunpack.c.l.b16 %v74
    %v112 = vunpack.c.l.b16 %v75
    %v113 = vunpack.c.l.b16 %v76
    %v114 = vunpack.c.l.b16 %v77
    %v115 = vunpack.c.l.b16 %v78
    %v116 = vunpack.c.l.b16 %v79
    %v117 = vunpack.c.l.b16 %v80
    %v118 = vunpack.c.l.b16 %v81
    %v119 = vunpack.c.l.b16 %v82
    %v120 = vpack.c.b16 %v105, %v104
    %v121 = vpack.c.b16 %v107, %v106
    %v122 = vpack.c.b16 %v109, %v108
    %v123 = vpack.c.b16 %v111, %v110
    %v124 = vpack.c.b16 %v113, %v112
    %v125 = vpack.c.b16 %v115, %v114
    %v126 = vpack.c.b16 %v117, %v116
    %v127 = vpack.c.b16 %v119, %v118
    %136 = vmatpush.bf16.msra.mxu0 %v127
    %137 = vmatpush.bf16.msra.mxu0 %v126
    %138 = vmatpush.bf16.msra.mxu0 %v125
    %139 = vmatpush.bf16.msra.mxu0 %v124
    %140 = vmatpush.bf16.msra.mxu0 %v123
    %141 = vmatpush.bf16.msra.mxu0 %v122
    %142 = vmatpush.bf16.msra.mxu0 %v121
    %143 = vmatpush.bf16.msra.mxu0 %v120
    %144 = vmatmul.bf16.gmra.mxu0 %v84
    %v145 = vpop.f32.mrf.mxu0
    %v146 = vadd.f32 %v86, %v145
    %v147 = vpop.f32.mrf.mxu0
    %148 = vdwg.mxu0
    %v149 = vmax.f32 %v146, 0.0
    %v150 = vld [vmem:[#allocation7] sm:$0xf]
    %v151 = vld [vmem:[#allocation7 + $0x4] sm:$0xf]
    %v152 = vld [vmem:[#allocation7 + $0x8] sm:$0xf]
    %v153 = vld [vmem:[#allocation7 + $0xc] sm:$0xf]
    %v154 = vld [vmem:[#allocation7 + $0x10] sm:$0xf]
    %v155 = vld [vmem:[#allocation7 + $0x14] sm:$0xf]
    %v156 = vld [vmem:[#allocation7 + $0x18] sm:$0xf]
    %v157 = vld [vmem:[#allocation7 + $0x1c] sm:$0xf]
    %v158 = vld [vmem:[#allocation7 + $0x20] sm:$0xf]
    %v159 = vld [vmem:[#allocation7 + $0x24] sm:$0xf]
    %v160 = vld [vmem:[#allocation7 + $0x28] sm:$0xf]
    %v161 = vld [vmem:[#allocation7 + $0x2c] sm:$0xf]
    %v162 = vld [vmem:[#allocation7 + $0x30] sm:$0xf]
    %v163 = vld [vmem:[#allocation7 + $0x34] sm:$0xf]
    %v164 = vld [vmem:[#allocation7 + $0x38] sm:$0xf]
    %v165 = vld [vmem:[#allocation7 + $0x3c] sm:$0xf]
    %v166 = vld [vmem:[%s4] sm:$0x1]
    %v167 = vpack.c.bf16 %v149, %v149
    %v169 = vperm.slane %v166, 0
    %v187 = vunpack.c.l.b16 %v150
    %v188 = vunpack.c.l.b16 %v151
    %v189 = vunpack.c.l.b16 %v152
    %v190 = vunpack.c.l.b16 %v153
    %v191 = vunpack.c.l.b16 %v154
    %v192 = vunpack.c.l.b16 %v155
    %v193 = vunpack.c.l.b16 %v156
    %v194 = vunpack.c.l.b16 %v157
    %v195 = vunpack.c.l.b16 %v158
    %v196 = vunpack.c.l.b16 %v159
    %v197 = vunpack.c.l.b16 %v160
    %v198 = vunpack.c.l.b16 %v161
    %v199 = vunpack.c.l.b16 %v162
    %v200 = vunpack.c.l.b16 %v163
    %v201 = vunpack.c.l.b16 %v164
    %v202 = vunpack.c.l.b16 %v165
    %v203 = vpack.c.b16 %v188, %v187
    %v204 = vpack.c.b16 %v190, %v189
    %v205 = vpack.c.b16 %v192, %v191
    %v206 = vpack.c.b16 %v194, %v193
    %v207 = vpack.c.b16 %v196, %v195
    %v208 = vpack.c.b16 %v198, %v197
    %v209 = vpack.c.b16 %v200, %v199
    %v210 = vpack.c.b16 %v202, %v201
    %219 = vmatpush.bf16.msra.mxu0 %v210
    %220 = vmatpush.bf16.msra.mxu0 %v209
    %221 = vmatpush.bf16.msra.mxu0 %v208
    %222 = vmatpush.bf16.msra.mxu0 %v207
    %223 = vmatpush.bf16.msra.mxu0 %v206
    %224 = vmatpush.bf16.msra.mxu0 %v205
    %225 = vmatpush.bf16.msra.mxu0 %v204
    %226 = vmatpush.bf16.msra.mxu0 %v203
    %227 = vmatmul.bf16.gmra.mxu0 %v167
    %v228 = vpop.f32.mrf.mxu0
    %v229 = vadd.f32 %v169, %v228
    %v230 = vpop.f32.mrf.mxu0
    %231 = vdwg.mxu0
    %v232 = vmax.f32 %v229, 0.0
    %233 = vst [vmem:[#allocation8] sm:$0xff] %v232
    // Predicated region
    $region34: #{tpu_custom_call.1} parent=1 // pred_check
      _
    $region35: #{tpu_custom_call.1} parent=1 // pred_check_branch
      %235 = sbr.rel (0) target = $region37
    $region36: #{tpu_custom_call.1} parent=1 // pred_region
      %237 = vsyncadd [#allocation4], 0
      %s239 = sshll.u32 [#allocation8], 4
      %s240 = int_to_ptr.vmem [resolvable:$true] %s239
      %s241 = sshll.u32 %s5, 4
      %s242 = int_to_ptr.hbm [resolvable:$true] %s241
      %244 = dma.vmem_to_hbm [thread:$0]  %s240, 128, %s242, [#allocation4]
    $region37: #{tpu_custom_call.1} parent=1 // pred_fallthru
      _
    // Predicated region
    $region38: #{tpu_custom_call.1} parent=1 // pred_check
      _
    $region39: #{tpu_custom_call.1} parent=1 // pred_check_branch
      %246 = sbr.rel (0) target = $region41
    $region40: #{tpu_custom_call.1} parent=1 // pred_region
      %248 = dma.done [#allocation4], 128
    $region41: #{tpu_custom_call.1} parent=1 // pred_fallthru
      _
    %249 = vsyncpa [#allocation3], 1
    %250 = vsyncpa [#allocation6], 1
    %251 = vsyncpa [#allocation4], 1

</llo_original>
